<compile_context>
chip_gen: v7x
topology: tpu7x:2x2x1
jax: 0.10.0
libtpu: 0.0.40
codegen_flags: <defaults>
</compile_context>

<pallas_src>
import jax
import jax.numpy as jnp
from jax.experimental import pallas as pl
from jax.experimental.pallas import tpu as pltpu

LN_EPS = 1e-5


def _round_up(x, m):
    return ((x + m - 1) // m) * m


def _cdiv(a, b):
    return (a + b - 1) // b


def _vmem_capacity_bytes():
    """Physical VMEM of the current chip; conservative fallback if unknown."""
    try:
        return int(pltpu.get_tpu_info().vmem_capacity_bytes)
    except Exception:
        return 64 * 1024 * 1024   # v7x per-TensorCore size: safe everywhere


def _ln_relu(y, g, b, out_dim, out_pad, out_dtype):
    """LayerNorm (biased variance, eps=1e-5) over the real out_dim + ReLU.

    `y` is f32 (tile_m, out_pad); padded lanes of y are exactly zero (the
    padded weight columns are zero), so sum/out_dim is the correct mean; the
    padded lanes are masked out of the variance.
    """
    inv_d = 1.0 / out_dim
    mean = jnp.sum(y, axis=-1, keepdims=True) * inv_d
    centered = y - mean
    if out_pad != out_dim:
        lane = jax.lax.broadcasted_iota(jnp.int32, y.shape, 1)
        centered = jnp.where(lane < out_dim, centered, 0.0)
    var = jnp.sum(centered * centered, axis=-1, keepdims=True) * inv_d
    yhat = centered * jax.lax.rsqrt(var + LN_EPS)
    z = yhat * g + b
    return jnp.maximum(z, 0.0).astype(out_dtype)


def _make_resident_kernel(out_dim, out_pad, compute_dtype):
    """Whole weight resident in VMEM: single dot, no accumulator scratch."""
    def kernel(x_ref, w_ref, g_ref, b_ref, o_ref):
        y = jnp.dot(x_ref[...].astype(compute_dtype), w_ref[...],
                    preferred_element_type=jnp.float32)
        o_ref[...] = _ln_relu(y, g_ref[...], b_ref[...],
                              out_dim, out_pad, o_ref.dtype)
    return kernel


def _make_streaming_kernel(out_dim, out_pad, compute_dtype):
    """Weight streamed along K into an f32 VMEM accumulator."""
    def kernel(x_ref, w_ref, g_ref, b_ref, o_ref, acc_ref):
        k = pl.program_id(1)

        @pl.when(k == 0)
        def _init():
            acc_ref[...] = jnp.zeros_like(acc_ref)

        acc_ref[...] += jnp.dot(x_ref[...].astype(compute_dtype), w_ref[...],
                                preferred_element_type=jnp.float32)

        @pl.when(k == pl.num_programs(1) - 1)
        def _finalize():
            o_ref[...] = _ln_relu(acc_ref[...], g_ref[...], b_ref[...],
                                  out_dim, out_pad, o_ref.dtype)
    return kernel


def euc_layer(x, weight, gamma, beta, *,
              tile_m=None,
              tile_k=None,
              compute_dtype=jnp.bfloat16,
              weight_resident_bytes=None,
              vmem_limit_bytes=None):
    """Fused EucLayer forward.

    x: (N, in_dim); weight: (in_dim, out_dim) (= PyTorch W.T);
    gamma/beta: (out_dim,) or (1, out_dim).
    compute_dtype: MXU operand dtype (accumulation & LayerNorm stay f32);
    pass jnp.float32 to reproduce the PyTorch numerics exactly.
    """
    N, in_dim = x.shape
    assert weight.shape[0] == in_dim
    out_dim = weight.shape[1]
    out_dtype = x.dtype

    if compute_dtype is None:
        compute_dtype = x.dtype
    cbytes = jnp.dtype(compute_dtype).itemsize
    x_bytes = jnp.dtype(x.dtype).itemsize
    o_bytes = jnp.dtype(out_dtype).itemsize
    sub = 8 if x_bytes >= 4 else 16          # sublane granularity of the x tile

    vmem_cap = _vmem_capacity_bytes()
    vmem_budget = int(0.85 * vmem_cap)       # leave headroom for Mosaic scratch
    big_vmem = vmem_cap >= 96 * 1024 * 1024  # v5e/v6e (128 MiB) vs v7x (64 MiB)
    if weight_resident_bytes is None:
        weight_resident_bytes = int(0.35 * vmem_cap)   # ~45 MiB / ~22 MiB
    if tile_k is None:
        tile_k = 1024 if big_vmem else 512
    if tile_m is None:
        tile_m = 512 if big_vmem else 256

    # Lane-dense output: pad out_dim to a multiple of 128 (unmasked vst).
    out_pad = _round_up(out_dim, 128)

    # --- M tiling: divisor-friendly tile (minimal padding), >=2 tiles for
    # --- nontrivial N so the v7x megacore can shard the parallel M axis.
    tile_m_req = max(sub, min(_round_up(tile_m, sub), _round_up(N, sub)))
    num_m = _cdiv(N, tile_m_req)
    if num_m == 1 and N >= 256:
        num_m = 2
    tile_m = _round_up(_cdiv(N, num_m), sub)
    n_pad = tile_m * num_m

    # --- Residency decision: keep the whole (padded) weight in VMEM
    # --- (single-buffered) whenever it fits; otherwise stream along K.
    w_resident_vmem = in_dim * out_pad * cbytes
    resident_est = (2 * tile_m * in_dim * x_bytes      # x blocks (double-buffered)
                    + w_resident_vmem                  # weight (single buffer)
                    + 4 * out_pad * 4                  # gamma / beta
                    + 2 * tile_m * out_pad * o_bytes)  # output blocks
    resident = (w_resident_vmem <= weight_resident_bytes
                and resident_est <= vmem_budget)
    if resident:
        tile_k, k_pad, num_k = in_dim, in_dim, 1
    else:
        tile_k = max(128, _round_up(min(tile_k, in_dim), 128))
        k_pad = _round_up(in_dim, tile_k)
        num_k = k_pad // tile_k

    # --- Operand prep.  gamma/beta/weight are constants of the layer: their
    # --- cast/pad is one-time work outside the per-call hot path.
    gamma = jnp.asarray(gamma, jnp.float32).reshape(1, out_dim)
    beta = jnp.asarray(beta, jnp.float32).reshape(1, out_dim)
    if out_pad != out_dim:
        gamma = jnp.pad(gamma, ((0, 0), (0, out_pad - out_dim)))
        beta = jnp.pad(beta, ((0, 0), (0, out_pad - out_dim)))

    wc = weight.astype(compute_dtype)
    if (k_pad, out_pad) != (in_dim, out_dim):
        wc = jnp.pad(wc, ((0, k_pad - in_dim), (0, out_pad - out_dim)))

    # x stays in its native dtype (cast happens inside the kernel);
    # pad only when the tiling actually requires it.
    xp = x
    if (n_pad, k_pad) != (N, in_dim):
        xp = jnp.pad(xp, ((0, n_pad - N), (0, k_pad - in_dim)))

    def _vmem_estimate(single_buffer_w):
        wbuf = 1 if (resident and single_buffer_w) else 2
        e = (2 * tile_m * tile_k * x_bytes
             + wbuf * tile_k * out_pad * cbytes
             + 4 * out_pad * 4
             + 2 * tile_m * out_pad * o_bytes)
        if not resident:
            e += tile_m * out_pad * 4            # f32 accumulator scratch
        return e

    def _call(single_buffer):
        def const_spec(shape, idx_map):
            # Constant index map -> single buffer (no pointless double-buffer).
            if single_buffer:
                return pl.BlockSpec(shape, idx_map,
                                    pipeline_mode=pl.Buffered(1))
            return pl.BlockSpec(shape, idx_map)

        vlim = vmem_limit_bytes
        if vlim is None:
            vlim = max(int(_vmem_estimate(single_buffer) * 1.5), 32 * 1024 * 1024)
        vlim = min(vlim, vmem_budget)            # never exceed physical VMEM

        if resident:
            kernel = _make_resident_kernel(out_dim, out_pad, compute_dtype)
            grid_spec = pltpu.PrefetchScalarGridSpec(
                num_scalar_prefetch=0,
                grid=(num_m,),
                in_specs=[
                    pl.BlockSpec((tile_m, in_dim), lambda i: (i, 0)),
                    const_spec((in_dim, out_pad), lambda i: (0, 0)),
                    const_spec((1, out_pad), lambda i: (0, 0)),
                    const_spec((1, out_pad), lambda i: (0, 0)),
                ],
                out_specs=pl.BlockSpec((tile_m, out_pad), lambda i: (i, 0)),
            )
            dims = ("parallel",)
        else:
            kernel = _make_streaming_kernel(out_dim, out_pad, compute_dtype)
            grid_spec = pltpu.PrefetchScalarGridSpec(
                num_scalar_prefetch=0,
                grid=(num_m, num_k),
                in_specs=[
                    pl.BlockSpec((tile_m, tile_k), lambda i, k: (i, k)),
                    pl.BlockSpec((tile_k, out_pad), lambda i, k: (k, 0)),
                    const_spec((1, out_pad), lambda i, k: (0, 0)),
                    const_spec((1, out_pad), lambda i, k: (0, 0)),
                ],
                out_specs=pl.BlockSpec((tile_m, out_pad), lambda i, k: (i, 0)),
                scratch_shapes=[pltpu.VMEM((tile_m, out_pad), jnp.float32)],
            )
            dims = ("parallel", "arbitrary")

        return pl.pallas_call(
            kernel,
            out_shape=jax.ShapeDtypeStruct((n_pad, out_pad), out_dtype),
            grid_spec=grid_spec,
            compiler_params=pltpu.CompilerParams(
                dimension_semantics=dims,
                vmem_limit_bytes=vlim,
            ),
        )(xp, wc, gamma, beta)

    try:
        out_padded = _call(single_buffer=True)
    except Exception:
        # pl.Buffered(1) rejected by this JAX/Mosaic build -> default buffering.
        out_padded = _call(single_buffer=False)

    if (n_pad, out_pad) != (N, out_dim):
        out_padded = out_padded[:N, :out_dim]
    return out_padded


def euc_layer_ref(x, weight, gamma, beta):
    """Pure-JAX f32 reference for correctness checking."""
    y = x.astype(jnp.float32) @ weight.astype(jnp.float32)
    mean = jnp.mean(y, axis=-1, keepdims=True)
    var = jnp.mean((y - mean) ** 2, axis=-1, keepdims=True)
    y = (y - mean) / jnp.sqrt(var + LN_EPS)
    y = y * gamma.reshape(1, -1) + beta.reshape(1, -1)
    return jnp.maximum(y, 0.0).astype(x.dtype)


if __name__ == "__main__":
    key = jax.random.PRNGKey(0)
    k_x, k_w, k_x2, k_w2 = jax.random.split(key, 4)

    # --- Small module-consistent case: (N, in_dim, out_dim) = (8, 32, 32) ---
    N, in_dim, out_dim = 8, 32, 32
    x = jax.random.normal(k_x, (N, in_dim), dtype=jnp.float32)
    # PyTorch weight shape is (out_dim, in_dim); kernel takes the transpose.
    w_pt = jax.random.normal(k_w, (out_dim, in_dim), dtype=jnp.float32) * (1.0 / in_dim) ** 0.5
    weight = w_pt.T                                   # (in_dim, out_dim)
    gamma = jnp.ones((out_dim,), dtype=jnp.float32)   # LayerNorm default affine
    beta = jnp.zeros((out_dim,), dtype=jnp.float32)
    ref = euc_layer_ref(x, weight, gamma, beta)

    # f32 compute path (exact PyTorch numerics): tight tolerance.
    out_f32 = jax.block_until_ready(
        euc_layer(x, weight, gamma, beta, compute_dtype=jnp.float32))
    assert out_f32.shape == (N, out_dim)
    assert jnp.allclose(out_f32, ref, atol=1e-4, rtol=1e-4)

    # Default bf16-MXU path (f32 accumulation + f32 LayerNorm): looser tolerance.
    out_bf16 = jax.block_until_ready(euc_layer(x, weight, gamma, beta))
    assert out_bf16.shape == (N, out_dim)
    assert jnp.allclose(out_bf16, ref, atol=3e-2, rtol=3e-2)

    # --- Larger case: M tiling + row padding, lane padding, both weight paths ---
    N2, in2, out2 = 200, 1024, 192
    x2 = jax.random.normal(k_x2, (N2, in2), dtype=jnp.float32)
    w2 = jax.random.normal(k_w2, (in2, out2), dtype=jnp.float32) * (1.0 / in2) ** 0.5
    g2 = jnp.ones((out2,), dtype=jnp.float32)
    b2 = jnp.zeros((out2,), dtype=jnp.float32)
    ref2 = euc_layer_ref(x2, w2, g2, b2)

    # Forced K-streaming path (accumulator + pl.when init/finalize).
    out2_k = jax.block_until_ready(
        euc_layer(x2, w2, g2, b2, tile_m=128, tile_k=256,
                  weight_resident_bytes=0))
    assert out2_k.shape == (N2, out2)
    assert jnp.allclose(out2_k, ref2, atol=5e-2, rtol=5e-2)

    # Default resident-weight path (weight fits comfortably in VMEM).
    out2_r = jax.block_until_ready(euc_layer(x2, w2, g2, b2))
    assert out2_r.shape == (N2, out2)
    assert jnp.allclose(out2_r, ref2, atol=5e-2, rtol=5e-2)

    print("KERNEL_OK")
</pallas_src>

<mosaic_0001>
module attributes {stable_mosaic.version = 11 : i64} {
  func.func @kernel(%arg0: i32, %arg1: memref<8x32xf32, #tpu.memory_space<vmem>>, %arg2: memref<32x128xf32, #tpu.memory_space<vmem>>, %arg3: memref<1x128xf32, #tpu.memory_space<vmem>>, %arg4: memref<1x128xf32, #tpu.memory_space<vmem>>, %arg5: memref<8x128xf32, #tpu.memory_space<vmem>>) attributes {dimension_semantics = [#tpu.dimension_semantics<parallel>], iteration_bounds = array<i64: 1>, scalar_prefetch = 0 : i64, scratch_operands = 0 : i64, tpu.core_type = #tpu.core_type<tc>, window_params = [{transform_indices = @transform_0, window_bounds = array<i64: 8, 32>}, {pipeline_mode = #tpu.pipeline_mode<synchronous>, transform_indices = @transform_1, window_bounds = array<i64: 32, 128>}, {pipeline_mode = #tpu.pipeline_mode<synchronous>, transform_indices = @transform_2, window_bounds = array<i64: 1, 128>}, {pipeline_mode = #tpu.pipeline_mode<synchronous>, transform_indices = @transform_3, window_bounds = array<i64: 1, 128>}, {transform_indices = @transform_4, window_bounds = array<i64: 8, 128>}]} {
    %c0 = arith.constant 0 : index
    %c0_0 = arith.constant 0 : index
    %0 = vector.load %arg1[%c0, %c0_0] : memref<8x32xf32, #tpu.memory_space<vmem>>, vector<8x32xf32>
    %c0_1 = arith.constant 0 : index
    %c0_2 = arith.constant 0 : index
    %1 = vector.load %arg2[%c0_1, %c0_2] : memref<32x128xf32, #tpu.memory_space<vmem>>, vector<32x128xf32>
    %cst = arith.constant dense<0.000000e+00> : vector<8x128xf32>
    %2 = tpu.matmul %0, %1, %cst {dimension_numbers = #tpu.dot_dimension_numbers<[1], [0], [0], [1], [0, 0, 1, 1], [], []>} : vector<8x32xf32>, vector<32x128xf32>, vector<8x128xf32> -> vector<8x128xf32>
    %c0_3 = arith.constant 0 : index
    %c0_4 = arith.constant 0 : index
    %3 = vector.load %arg3[%c0_3, %c0_4] : memref<1x128xf32, #tpu.memory_space<vmem>>, vector<1x128xf32>
    %c0_5 = arith.constant 0 : index
    %c0_6 = arith.constant 0 : index
    %4 = vector.load %arg4[%c0_5, %c0_6] : memref<1x128xf32, #tpu.memory_space<vmem>>, vector<1x128xf32>
    %cst_7 = arith.constant dense<0.000000e+00> : vector<8xf32>
    %5 = vector.multi_reduction <add>, %2, %cst_7 [1] : vector<8x128xf32> to vector<8xf32>
    %6 = vector.shape_cast %5 : vector<8xf32> to vector<8x1xf32>
    %cst_8 = arith.constant 3.125000e-02 : f32
    %7 = vector.broadcast %cst_8 : f32 to vector<8x1xf32>
    %8 = arith.mulf %6, %7 : vector<8x1xf32>
    %9 = vector.broadcast %8 : vector<8x1xf32> to vector<8x128xf32>
    %10 = arith.subf %2, %9 : vector<8x128xf32>
    %11 = tpu.iota {dimensions = array<i32: 1>} : vector<8x128xi32>
    %c32_i32 = arith.constant 32 : i32
    %12 = vector.broadcast %c32_i32 : i32 to vector<8x128xi32>
    %13 = arith.cmpi slt, %11, %12 : vector<8x128xi32>
    %cst_9 = arith.constant 0.000000e+00 : f32
    %14 = vector.broadcast %cst_9 : f32 to vector<8x128xf32>
    %15 = arith.select %13, %10, %14 : vector<8x128xi1>, vector<8x128xf32>
    %16 = arith.mulf %15, %15 : vector<8x128xf32>
    %cst_10 = arith.constant dense<0.000000e+00> : vector<8xf32>
    %17 = vector.multi_reduction <add>, %16, %cst_10 [1] : vector<8x128xf32> to vector<8xf32>
    %18 = vector.shape_cast %17 : vector<8xf32> to vector<8x1xf32>
    %cst_11 = arith.constant 3.125000e-02 : f32
    %19 = vector.broadcast %cst_11 : f32 to vector<8x1xf32>
    %20 = arith.mulf %18, %19 : vector<8x1xf32>
    %cst_12 = arith.constant 9.99999974E-6 : f32
    %21 = vector.broadcast %cst_12 : f32 to vector<8x1xf32>
    %22 = arith.addf %20, %21 : vector<8x1xf32>
    %23 = math.rsqrt %22 : vector<8x1xf32>
    %24 = vector.broadcast %23 : vector<8x1xf32> to vector<8x128xf32>
    %25 = arith.mulf %15, %24 : vector<8x128xf32>
    %26 = vector.broadcast %3 : vector<1x128xf32> to vector<8x128xf32>
    %27 = arith.mulf %25, %26 : vector<8x128xf32>
    %28 = vector.broadcast %4 : vector<1x128xf32> to vector<8x128xf32>
    %29 = arith.addf %27, %28 : vector<8x128xf32>
    %cst_13 = arith.constant 0.000000e+00 : f32
    %30 = vector.broadcast %cst_13 : f32 to vector<8x128xf32>
    %31 = arith.maximumf %29, %30 : vector<8x128xf32>
    %c0_14 = arith.constant 0 : index
    %c0_15 = arith.constant 0 : index
    %32 = vector.load %arg5[%c0_14, %c0_15] : memref<8x128xf32, #tpu.memory_space<vmem>>, vector<8x128xf32>
    tpu.vector_store %arg5[%c0_14, %c0_15], %31 {strides = array<i32>} : memref<8x128xf32, #tpu.memory_space<vmem>>, vector<8x128xf32>,
    return
  }
  func.func @transform_0(%arg0: i32) -> (i32, i32) {
    %c0_i32 = arith.constant 0 : i32
    %c0_i32_0 = arith.constant 0 : i32
    return %arg0, %c0_i32 : i32, i32
  }
  func.func @transform_1(%arg0: i32) -> (i32, i32) {
    %c0_i32 = arith.constant 0 : i32
    %c0_i32_0 = arith.constant 0 : i32
    %c0_i32_1 = arith.constant 0 : i32
    return %c0_i32, %c0_i32_0 : i32, i32
  }
  func.func @transform_2(%arg0: i32) -> (i32, i32) {
    %c0_i32 = arith.constant 0 : i32
    %c0_i32_0 = arith.constant 0 : i32
    %c0_i32_1 = arith.constant 0 : i32
    return %c0_i32, %c0_i32_0 : i32, i32
  }
  func.func @transform_3(%arg0: i32) -> (i32, i32) {
    %c0_i32 = arith.constant 0 : i32
    %c0_i32_0 = arith.constant 0 : i32
    %c0_i32_1 = arith.constant 0 : i32
    return %c0_i32, %c0_i32_0 : i32, i32
  }
  func.func @transform_4(%arg0: i32) -> (i32, i32) {
    %c0_i32 = arith.constant 0 : i32
    %c0_i32_0 = arith.constant 0 : i32
    return %arg0, %c0_i32 : i32, i32
  }
}

module attributes {stable_mosaic.version = 11 : i64} {
  func.func @kernel(%arg0: i32, %arg1: memref<8x32xf32, #tpu.memory_space<vmem>>, %arg2: memref<32x128xf32, #tpu.memory_space<vmem>>, %arg3: memref<1x128xf32, #tpu.memory_space<vmem>>, %arg4: memref<1x128xf32, #tpu.memory_space<vmem>>, %arg5: memref<8x128xf32, #tpu.memory_space<vmem>>) attributes {dimension_semantics = [#tpu.dimension_semantics<parallel>], iteration_bounds = array<i64: 1>, scalar_prefetch = 0 : i64, scratch_operands = 0 : i64, tpu.core_type = #tpu.core_type<tc>, window_params = [{transform_indices = @transform_0, window_bounds = array<i64: 8, 32>}, {pipeline_mode = #tpu.pipeline_mode<synchronous>, transform_indices = @transform_1, window_bounds = array<i64: 32, 128>}, {pipeline_mode = #tpu.pipeline_mode<synchronous>, transform_indices = @transform_2, window_bounds = array<i64: 1, 128>}, {pipeline_mode = #tpu.pipeline_mode<synchronous>, transform_indices = @transform_3, window_bounds = array<i64: 1, 128>}, {transform_indices = @transform_4, window_bounds = array<i64: 8, 128>}]} {
    %c0 = arith.constant 0 : index
    %c0_0 = arith.constant 0 : index
    %0 = vector.load %arg1[%c0, %c0_0] : memref<8x32xf32, #tpu.memory_space<vmem>>, vector<8x32xf32>
    %c0_1 = arith.constant 0 : index
    %c0_2 = arith.constant 0 : index
    %1 = vector.load %arg2[%c0_1, %c0_2] : memref<32x128xf32, #tpu.memory_space<vmem>>, vector<32x128xf32>
    %cst = arith.constant dense<0.000000e+00> : vector<8x128xf32>
    %2 = tpu.matmul %0, %1, %cst {dimension_numbers = #tpu.dot_dimension_numbers<[1], [0], [0], [1], [0, 0, 1, 1], [], []>} : vector<8x32xf32>, vector<32x128xf32>, vector<8x128xf32> -> vector<8x128xf32>
    %c0_3 = arith.constant 0 : index
    %c0_4 = arith.constant 0 : index
    %3 = vector.load %arg3[%c0_3, %c0_4] : memref<1x128xf32, #tpu.memory_space<vmem>>, vector<1x128xf32>
    %c0_5 = arith.constant 0 : index
    %c0_6 = arith.constant 0 : index
    %4 = vector.load %arg4[%c0_5, %c0_6] : memref<1x128xf32, #tpu.memory_space<vmem>>, vector<1x128xf32>
    %cst_7 = arith.constant dense<0.000000e+00> : vector<8xf32>
    %5 = vector.multi_reduction <add>, %2, %cst_7 [1] : vector<8x128xf32> to vector<8xf32>
    %6 = vector.shape_cast %5 : vector<8xf32> to vector<8x1xf32>
    %cst_8 = arith.constant 3.125000e-02 : f32
    %7 = vector.broadcast %cst_8 : f32 to vector<8x1xf32>
    %8 = arith.mulf %6, %7 : vector<8x1xf32>
    %9 = vector.broadcast %8 : vector<8x1xf32> to vector<8x128xf32>
    %10 = arith.subf %2, %9 : vector<8x128xf32>
    %11 = tpu.iota {dimensions = array<i32: 1>} : vector<8x128xi32>
    %c32_i32 = arith.constant 32 : i32
    %12 = vector.broadcast %c32_i32 : i32 to vector<8x128xi32>
    %13 = arith.cmpi slt, %11, %12 : vector<8x128xi32>
    %cst_9 = arith.constant 0.000000e+00 : f32
    %14 = vector.broadcast %cst_9 : f32 to vector<8x128xf32>
    %15 = arith.select %13, %10, %14 : vector<8x128xi1>, vector<8x128xf32>
    %16 = arith.mulf %15, %15 : vector<8x128xf32>
    %cst_10 = arith.constant dense<0.000000e+00> : vector<8xf32>
    %17 = vector.multi_reduction <add>, %16, %cst_10 [1] : vector<8x128xf32> to vector<8xf32>
    %18 = vector.shape_cast %17 : vector<8xf32> to vector<8x1xf32>
    %cst_11 = arith.constant 3.125000e-02 : f32
    %19 = vector.broadcast %cst_11 : f32 to vector<8x1xf32>
    %20 = arith.mulf %18, %19 : vector<8x1xf32>
    %cst_12 = arith.constant 9.99999974E-6 : f32
    %21 = vector.broadcast %cst_12 : f32 to vector<8x1xf32>
    %22 = arith.addf %20, %21 : vector<8x1xf32>
    %23 = math.rsqrt %22 : vector<8x1xf32>
    %24 = vector.broadcast %23 : vector<8x1xf32> to vector<8x128xf32>
    %25 = arith.mulf %15, %24 : vector<8x128xf32>
    %26 = vector.broadcast %3 : vector<1x128xf32> to vector<8x128xf32>
    %27 = arith.mulf %25, %26 : vector<8x128xf32>
    %28 = vector.broadcast %4 : vector<1x128xf32> to vector<8x128xf32>
    %29 = arith.addf %27, %28 : vector<8x128xf32>
    %cst_13 = arith.constant 0.000000e+00 : f32
    %30 = vector.broadcast %cst_13 : f32 to vector<8x128xf32>
    %31 = arith.maximumf %29, %30 : vector<8x128xf32>
    %c0_14 = arith.constant 0 : index
    %c0_15 = arith.constant 0 : index
    %32 = vector.load %arg5[%c0_14, %c0_15] : memref<8x128xf32, #tpu.memory_space<vmem>>, vector<8x128xf32>
    tpu.vector_store %arg5[%c0_14, %c0_15], %31 {strides = array<i32>} : memref<8x128xf32, #tpu.memory_space<vmem>>, vector<8x128xf32>,
    return
  }
  func.func @transform_0(%arg0: i32) -> (i32, i32) {
    %c0_i32 = arith.constant 0 : i32
    %c0_i32_0 = arith.constant 0 : i32
    return %arg0, %c0_i32 : i32, i32
  }
  func.func @transform_1(%arg0: i32) -> (i32, i32) {
    %c0_i32 = arith.constant 0 : i32
    %c0_i32_0 = arith.constant 0 : i32
    %c0_i32_1 = arith.constant 0 : i32
    return %c0_i32, %c0_i32_0 : i32, i32
  }
  func.func @transform_2(%arg0: i32) -> (i32, i32) {
    %c0_i32 = arith.constant 0 : i32
    %c0_i32_0 = arith.constant 0 : i32
    %c0_i32_1 = arith.constant 0 : i32
    return %c0_i32, %c0_i32_0 : i32, i32
  }
  func.func @transform_3(%arg0: i32) -> (i32, i32) {
    %c0_i32 = arith.constant 0 : i32
    %c0_i32_0 = arith.constant 0 : i32
    %c0_i32_1 = arith.constant 0 : i32
    return %c0_i32, %c0_i32_0 : i32, i32
  }
  func.func @transform_4(%arg0: i32) -> (i32, i32) {
    %c0_i32 = arith.constant 0 : i32
    %c0_i32_0 = arith.constant 0 : i32
    return %arg0, %c0_i32 : i32, i32
  }
}

</mosaic_0001>

<llo_original>
// kernel: tpu_custom_call.1
$region0: #{tpu_custom_call.1}
  #allocation0 [shape = 'u32[]', space=smem, size = 0x4, offset = 0x4, fixed_abs, tag = 'smem constant byte address 0x4 - core index']
  #allocation1 [shape = 'u32[144,128]{1,0:T(1,128)}', space=vmem, size = 0x12000, scoped, tag = 'internal scratch']
  %s0 = inlined_call_operand.hbm [shape: f32[8,32], index: 0, kind: input, shape index: {}]
  %s1 = inlined_call_operand.hbm [shape: f32[32,128], index: 1, kind: input, shape index: {}]
  %s2 = inlined_call_operand.vmem [shape: f32[1,128], index: 2, kind: input, shape index: {}]
  %s3 = inlined_call_operand.vmem [shape: f32[1,128], index: 3, kind: input, shape index: {}]
  %s4 = inlined_call_operand.hbm [shape: f32[8,128], index: 4, kind: output, shape index: {}]
  %s5 = sld [smem:[#allocation0]]
  $region34: #{tpu_custom_call.1} parent=0
    _
  %s7 = ssub.s32 1, %s5
  %s8 = scalar_select 0, %s7, %s5
  $region1: #{tpu_custom_call.1} parent=0
    #allocation2 [shape = 'u8[4096]{0}', space=vmem, size = 0x1000, scoped, tag = 'input window, operand 0, single buffered']
    #allocation3 [shape = 's32[1]{0}', space=sflag, size = 0x4, scoped, tag = 'scoped memory for tpu_custom_call.1']
    #allocation4 [shape = 's32[1]{0}', space=sflag, size = 0x4, scoped, tag = 'scoped memory for tpu_custom_call.1']
    #allocation5 [shape = 'u8[16384]{0}', space=vmem, size = 0x4000, scoped, tag = 'input window, operand 1, single buffered']
    #allocation6 [shape = 's32[1]{0}', space=sflag, size = 0x4, scoped, tag = 'scoped memory for tpu_custom_call.1']
    #allocation7 [shape = 'u8[4096]{0}', space=vmem, size = 0x1000, scoped, tag = 'output window, operand 0, single buffered']
    %9 = vsyncpa [#allocation3], 0
    %10 = vsyncpa [#allocation6], 0
    %11 = vsyncpa [#allocation4], 0
    // Predicated region
    $region2: #{tpu_custom_call.1} parent=1 // pred_check
      _
    $region3: #{tpu_custom_call.1} parent=1 // pred_check_branch
      %13 = sbr.rel (0) target = $region5
    $region4: #{tpu_custom_call.1} parent=1 // pred_region
      %s15 = ssub.s32 128, 128
      %16 = vsyncadd [#allocation3], %s15
      %s18 = sshll.u32 [#allocation2], 4
      %s19 = int_to_ptr.vmem [resolvable:$true] %s18
      %21 = dma.hbm_to_vmem [thread:$0]  %s0, 128, %s19, [#allocation3]
    $region5: #{tpu_custom_call.1} parent=1 // pred_fallthru
      _
    // Predicated region
    $region6: #{tpu_custom_call.1} parent=1 // pred_check
      _
    $region7: #{tpu_custom_call.1} parent=1 // pred_check_branch
      %23 = sbr.rel (0) target = $region9
    $region8: #{tpu_custom_call.1} parent=1 // pred_region
      %s25 = ssub.s32 512, 512
      %26 = vsyncadd [#allocation6], %s25
      %s27 = sshll.u32 [#allocation5], 4
      %s28 = int_to_ptr.vmem [resolvable:$true] %s27
      %33 = dma.hbm_to_vmem [thread:$0]  %s1, 512, %s28, [#allocation6], 128, 128, 8
    $region9: #{tpu_custom_call.1} parent=1 // pred_fallthru
      _
    // Predicated region
    $region10: #{tpu_custom_call.1} parent=1 // pred_check
      _
    $region11: #{tpu_custom_call.1} parent=1 // pred_check_branch
      %35 = sbr.rel (0) target = $region13
    $region12: #{tpu_custom_call.1} parent=1 // pred_region
      _
    $region13: #{tpu_custom_call.1} parent=1 // pred_fallthru
      _
    // Predicated region
    $region14: #{tpu_custom_call.1} parent=1 // pred_check
      _
    $region15: #{tpu_custom_call.1} parent=1 // pred_check_branch
      %37 = sbr.rel (0) target = $region17
    $region16: #{tpu_custom_call.1} parent=1 // pred_region
      _
    $region17: #{tpu_custom_call.1} parent=1 // pred_fallthru
      _
    // Predicated region
    $region18: #{tpu_custom_call.1} parent=1 // pred_check
      _
    $region19: #{tpu_custom_call.1} parent=1 // pred_check_branch
      %39 = sbr.rel (0) target = $region21
    $region20: #{tpu_custom_call.1} parent=1 // pred_region
      %40 = dma.done [#allocation3], 128
    $region21: #{tpu_custom_call.1} parent=1 // pred_fallthru
      _
    // Predicated region
    $region22: #{tpu_custom_call.1} parent=1 // pred_check
      _
    $region23: #{tpu_custom_call.1} parent=1 // pred_check_branch
      %42 = sbr.rel (0) target = $region25
    $region24: #{tpu_custom_call.1} parent=1 // pred_region
      %43 = dma.done [#allocation6], 512
    $region25: #{tpu_custom_call.1} parent=1 // pred_fallthru
      _
    %v44 = vld [vmem:[#allocation2] sm:$0xff]
    %v45 = vld [vmem:[#allocation5] sm:$0xff]
    %v46 = vld [vmem:[#allocation5 + $0x8] sm:$0xff]
    %v47 = vld [vmem:[#allocation5 + $0x10] sm:$0xff]
    %v48 = vld [vmem:[#allocation5 + $0x18] sm:$0xff]
    %vm49 = vcmask 261120
    %v51 = vsel %vm49, %v44, 0
    %53 = vmatprep.subr.mxu0 0.0
    %54 = vmatpush1.msra.mxu0 %v45
    %55 = vmatprep.subr.mxu0 0.0
    %56 = vmatpush1.msra.mxu0 %v46
    %57 = vmatprep.subr.mxu0 0.0
    %58 = vmatpush1.msra.mxu0 %v47
    %59 = vmatprep.subr.mxu0 0.0
    %60 = vmatpush1.msra.mxu0 %v48
    %61 = vmatprep.subr.mxu0 0.0
    %62 = vmatpush1.msra.mxu0 0.0
    %63 = vmatprep.subr.mxu0 0.0
    %64 = vmatpush1.msra.mxu0 0.0
    %65 = vmatprep.subr.mxu0 0.0
    %66 = vmatpush1.msra.mxu0 0.0
    %67 = vmatprep.subr.mxu0 0.0
    %68 = vmatpush1.msra.mxu0 0.0
    %69 = vmatprep.subr.mxu0 0.0
    %70 = vmatpush1.msra.mxu0 0.0
    %71 = vmatprep.subr.mxu0 0.0
    %72 = vmatpush1.msra.mxu0 0.0
    %73 = vmatprep.subr.mxu0 0.0
    %74 = vmatpush1.msra.mxu0 0.0
    %75 = vmatprep.subr.mxu0 0.0
    %76 = vmatpush1.msra.mxu0 0.0
    %77 = vmatprep.subr.mxu0 0.0
    %78 = vmatpush1.msra.mxu0 0.0
    %79 = vmatprep.subr.mxu0 0.0
    %80 = vmatpush1.msra.mxu0 0.0
    %81 = vmatprep.subr.mxu0 0.0
    %82 = vmatpush1.msra.mxu0 0.0
    %83 = vmatprep.subr.mxu0 0.0
    %84 = vmatpush1.msra.mxu0 0.0
    %85 = vmatprep.subr.mxu0 0.0
    %86 = vmatpush1.msra.mxu0 0.0
    %87 = vmatprep.subr.mxu0 0.0
    %88 = vmatpush1.msra.mxu0 0.0
    %89 = vmatprep.subr.mxu0 0.0
    %90 = vmatpush1.msra.mxu0 0.0
    %91 = vmatprep.subr.mxu0 0.0
    %92 = vmatpush1.msra.mxu0 0.0
    %93 = vmatprep.subr.mxu0 0.0
    %94 = vmatpush1.msra.mxu0 0.0
    %95 = vmatprep.subr.mxu0 0.0
    %96 = vmatpush1.msra.mxu0 0.0
    %97 = vmatprep.subr.mxu0 0.0
    %98 = vmatpush1.msra.mxu0 0.0
    %99 = vmatprep.subr.mxu0 0.0
    %100 = vmatpush1.msra.mxu0 0.0
    %101 = vmatprep.subr.mxu0 0.0
    %102 = vmatpush1.msra.mxu0 0.0
    %103 = vmatprep.subr.mxu0 0.0
    %104 = vmatpush1.msra.mxu0 0.0
    %105 = vmatprep.subr.mxu0 0.0
    %106 = vmatpush1.msra.mxu0 0.0
    %107 = vmatprep.subr.mxu0 0.0
    %108 = vmatpush1.msra.mxu0 0.0
    %109 = vmatprep.subr.mxu0 0.0
    %110 = vmatpush1.msra.mxu0 0.0
    %111 = vmatprep.subr.mxu0 0.0
    %112 = vmatpush1.msra.mxu0 0.0
    %113 = vmatprep.subr.mxu0 0.0
    %114 = vmatpush1.msra.mxu0 0.0
    %115 = vmatprep.subr.mxu0 0.0
    %116 = vmatpush1.msra.mxu0 0.0
    %117 = vmatprep.mubr.f32.mxu0 0.0
    %118 = vmatmul.mubr.f32.gmra.mrb[0].mxu0 %v51
    %v119 = vpop.f32.mrb[0].mxu0
    %v120 = vadd.f32 0.0, %v119
    %v121 = vpop.f32.mrb[0].mxu0
    %122 = vdwg.mxu0
    %v123 = vld [vmem:[%s2] sm:$0x1]
    %v124 = vld [vmem:[%s3] sm:$0x1]
    %125 = vadd.xlane.f32.xlu0 %v120
    %v126 = vpop.xlane.xlu0 %125
    %v127 = vmul.f32 %v126, 0.03125
    %v128 = vsub.f32 %v120, %v127
    %v129 = vlaneseq
    %v130 = vand.u32 %v129, 127
    %vm131 = vcmp.lt.s32.totalorder %v130, 32
    %v132 = vsel %vm131, %v128, 0.0
    %v133 = vmul.f32 %v132, %v132
    %134 = vadd.xlane.f32.xlu0 %v133
    %v135 = vpop.xlane.xlu0 %134
    %v136 = vmul.f32 %v135, 0.03125
    %v137 = vadd.f32 %v136, 1e-05
    %v138 = vrsqrt.pop %v137
    %v139 = vmul.f32 %v132, %v138
    %v141 = vlaneseq
    %v142 = vshrl.u32 %v141, 7
    %v143 = vsub.s32 0, %v142
    %v144 = vrot.slane %v123, %v143
    %v146 = vmul.f32 %v139, %v144
    %v148 = vlaneseq
    %v149 = vshrl.u32 %v148, 7
    %v150 = vsub.s32 0, %v149
    %v151 = vrot.slane %v124, %v150
    %v153 = vadd.f32 %v146, %v151
    %v154 = vmax.f32 %v153, 0.0
    %155 = vst [vmem:[#allocation7] sm:$0xff] %v154
    // Predicated region
    $region26: #{tpu_custom_call.1} parent=1 // pred_check
      _
    $region27: #{tpu_custom_call.1} parent=1 // pred_check_branch
      %157 = sbr.rel (0) target = $region29
    $region28: #{tpu_custom_call.1} parent=1 // pred_region
      %s159 = ssub.s32 128, 128
      %160 = vsyncadd [#allocation4], %s159
      %s162 = sshll.u32 [#allocation7], 4
      %s163 = int_to_ptr.vmem [resolvable:$true] %s162
      %165 = dma.vmem_to_hbm [thread:$0]  %s163, 128, %s4, [#allocation4]
    $region29: #{tpu_custom_call.1} parent=1 // pred_fallthru
      _
    // Predicated region
    $region30: #{tpu_custom_call.1} parent=1 // pred_check
      _
    $region31: #{tpu_custom_call.1} parent=1 // pred_check_branch
      %167 = sbr.rel (0) target = $region33
    $region32: #{tpu_custom_call.1} parent=1 // pred_region
      %168 = dma.done [#allocation4], 128
    $region33: #{tpu_custom_call.1} parent=1 // pred_fallthru
      _
    %169 = vsyncpa [#allocation3], 1
    %170 = vsyncpa [#allocation6], 1
    %171 = vsyncpa [#allocation4], 1

// kernel: tpu_custom_call.1
$region0: #{tpu_custom_call.1}
  #allocation0 [shape = 'u32[]', space=smem, size = 0x4, offset = 0x4, fixed_abs, tag = 'smem constant byte address 0x4 - core index']
  #allocation1 [shape = 'u32[144,128]{1,0:T(1,128)}', space=vmem, size = 0x12000, scoped, tag = 'internal scratch']
  %s0 = inlined_call_operand.hbm [shape: f32[8,32], index: 0, kind: input, shape index: {}]
  %s1 = inlined_call_operand.hbm [shape: f32[32,128], index: 1, kind: input, shape index: {}]
  %s2 = inlined_call_operand.vmem [shape: f32[1,128], index: 2, kind: input, shape index: {}]
  %s3 = inlined_call_operand.vmem [shape: f32[1,128], index: 3, kind: input, shape index: {}]
  %s4 = inlined_call_operand.hbm [shape: f32[8,128], index: 4, kind: output, shape index: {}]
  %s5 = sld [smem:[#allocation0]]
  $region34: #{tpu_custom_call.1} parent=0
    _
  %s7 = ssub.s32 1, %s5
  %s8 = scalar_select 0, %s7, %s5
  $region1: #{tpu_custom_call.1} parent=0
    #allocation2 [shape = 'u8[4096]{0}', space=vmem, size = 0x1000, scoped, tag = 'input window, operand 0, single buffered']
    #allocation3 [shape = 's32[1]{0}', space=sflag, size = 0x4, scoped, tag = 'scoped memory for tpu_custom_call.1']
    #allocation4 [shape = 's32[1]{0}', space=sflag, size = 0x4, scoped, tag = 'scoped memory for tpu_custom_call.1']
    #allocation5 [shape = 'u8[16384]{0}', space=vmem, size = 0x4000, scoped, tag = 'input window, operand 1, single buffered']
    #allocation6 [shape = 's32[1]{0}', space=sflag, size = 0x4, scoped, tag = 'scoped memory for tpu_custom_call.1']
    #allocation7 [shape = 'u8[4096]{0}', space=vmem, size = 0x1000, scoped, tag = 'output window, operand 0, single buffered']
    %9 = vsyncpa [#allocation3], 0
    %10 = vsyncpa [#allocation6], 0
    %11 = vsyncpa [#allocation4], 0
    // Predicated region
    $region2: #{tpu_custom_call.1} parent=1 // pred_check
      _
    $region3: #{tpu_custom_call.1} parent=1 // pred_check_branch
      %13 = sbr.rel (0) target = $region5
    $region4: #{tpu_custom_call.1} parent=1 // pred_region
      %s15 = ssub.s32 128, 128
      %16 = vsyncadd [#allocation3], %s15
      %s18 = sshll.u32 [#allocation2], 4
      %s19 = int_to_ptr.vmem [resolvable:$true] %s18
      %21 = dma.hbm_to_vmem [thread:$0]  %s0, 128, %s19, [#allocation3]
    $region5: #{tpu_custom_call.1} parent=1 // pred_fallthru
      _
    // Predicated region
    $region6: #{tpu_custom_call.1} parent=1 // pred_check
      _
    $region7: #{tpu_custom_call.1} parent=1 // pred_check_branch
      %23 = sbr.rel (0) target = $region9
    $region8: #{tpu_custom_call.1} parent=1 // pred_region
      %s25 = ssub.s32 512, 512
      %26 = vsyncadd [#allocation6], %s25
      %s27 = sshll.u32 [#allocation5], 4
      %s28 = int_to_ptr.vmem [resolvable:$true] %s27
      %33 = dma.hbm_to_vmem [thread:$0]  %s1, 512, %s28, [#allocation6], 128, 128, 8
    $region9: #{tpu_custom_call.1} parent=1 // pred_fallthru
      _
    // Predicated region
    $region10: #{tpu_custom_call.1} parent=1 // pred_check
      _
    $region11: #{tpu_custom_call.1} parent=1 // pred_check_branch
      %35 = sbr.rel (0) target = $region13
    $region12: #{tpu_custom_call.1} parent=1 // pred_region
      _
    $region13: #{tpu_custom_call.1} parent=1 // pred_fallthru
      _
    // Predicated region
    $region14: #{tpu_custom_call.1} parent=1 // pred_check
      _
    $region15: #{tpu_custom_call.1} parent=1 // pred_check_branch
      %37 = sbr.rel (0) target = $region17
    $region16: #{tpu_custom_call.1} parent=1 // pred_region
      _
    $region17: #{tpu_custom_call.1} parent=1 // pred_fallthru
      _
    // Predicated region
    $region18: #{tpu_custom_call.1} parent=1 // pred_check
      _
    $region19: #{tpu_custom_call.1} parent=1 // pred_check_branch
      %39 = sbr.rel (0) target = $region21
    $region20: #{tpu_custom_call.1} parent=1 // pred_region
      %40 = dma.done [#allocation3], 128
    $region21: #{tpu_custom_call.1} parent=1 // pred_fallthru
      _
    // Predicated region
    $region22: #{tpu_custom_call.1} parent=1 // pred_check
      _
    $region23: #{tpu_custom_call.1} parent=1 // pred_check_branch
      %42 = sbr.rel (0) target = $region25
    $region24: #{tpu_custom_call.1} parent=1 // pred_region
      %43 = dma.done [#allocation6], 512
    $region25: #{tpu_custom_call.1} parent=1 // pred_fallthru
      _
    %v44 = vld [vmem:[#allocation2] sm:$0xff]
    %v45 = vld [vmem:[#allocation5] sm:$0xff]
    %v46 = vld [vmem:[#allocation5 + $0x8] sm:$0xff]
    %v47 = vld [vmem:[#allocation5 + $0x10] sm:$0xff]
    %v48 = vld [vmem:[#allocation5 + $0x18] sm:$0xff]
    %vm49 = vcmask 261120
    %v51 = vsel %vm49, %v44, 0
    %53 = vmatprep.subr.mxu0 0.0
    %54 = vmatpush1.msra.mxu0 %v45
    %55 = vmatprep.subr.mxu0 0.0
    %56 = vmatpush1.msra.mxu0 %v46
    %57 = vmatprep.subr.mxu0 0.0
    %58 = vmatpush1.msra.mxu0 %v47
    %59 = vmatprep.subr.mxu0 0.0
    %60 = vmatpush1.msra.mxu0 %v48
    %61 = vmatprep.subr.mxu0 0.0
    %62 = vmatpush1.msra.mxu0 0.0
    %63 = vmatprep.subr.mxu0 0.0
    %64 = vmatpush1.msra.mxu0 0.0
    %65 = vmatprep.subr.mxu0 0.0
    %66 = vmatpush1.msra.mxu0 0.0
    %67 = vmatprep.subr.mxu0 0.0
    %68 = vmatpush1.msra.mxu0 0.0
    %69 = vmatprep.subr.mxu0 0.0
    %70 = vmatpush1.msra.mxu0 0.0
    %71 = vmatprep.subr.mxu0 0.0
    %72 = vmatpush1.msra.mxu0 0.0
    %73 = vmatprep.subr.mxu0 0.0
    %74 = vmatpush1.msra.mxu0 0.0
    %75 = vmatprep.subr.mxu0 0.0
    %76 = vmatpush1.msra.mxu0 0.0
    %77 = vmatprep.subr.mxu0 0.0
    %78 = vmatpush1.msra.mxu0 0.0
    %79 = vmatprep.subr.mxu0 0.0
    %80 = vmatpush1.msra.mxu0 0.0
    %81 = vmatprep.subr.mxu0 0.0
    %82 = vmatpush1.msra.mxu0 0.0
    %83 = vmatprep.subr.mxu0 0.0
    %84 = vmatpush1.msra.mxu0 0.0
    %85 = vmatprep.subr.mxu0 0.0
    %86 = vmatpush1.msra.mxu0 0.0
    %87 = vmatprep.subr.mxu0 0.0
    %88 = vmatpush1.msra.mxu0 0.0
    %89 = vmatprep.subr.mxu0 0.0
    %90 = vmatpush1.msra.mxu0 0.0
    %91 = vmatprep.subr.mxu0 0.0
    %92 = vmatpush1.msra.mxu0 0.0
    %93 = vmatprep.subr.mxu0 0.0
    %94 = vmatpush1.msra.mxu0 0.0
    %95 = vmatprep.subr.mxu0 0.0
    %96 = vmatpush1.msra.mxu0 0.0
    %97 = vmatprep.subr.mxu0 0.0
    %98 = vmatpush1.msra.mxu0 0.0
    %99 = vmatprep.subr.mxu0 0.0
    %100 = vmatpush1.msra.mxu0 0.0
    %101 = vmatprep.subr.mxu0 0.0
    %102 = vmatpush1.msra.mxu0 0.0
    %103 = vmatprep.subr.mxu0 0.0
    %104 = vmatpush1.msra.mxu0 0.0
    %105 = vmatprep.subr.mxu0 0.0
    %106 = vmatpush1.msra.mxu0 0.0
    %107 = vmatprep.subr.mxu0 0.0
    %108 = vmatpush1.msra.mxu0 0.0
    %109 = vmatprep.subr.mxu0 0.0
    %110 = vmatpush1.msra.mxu0 0.0
    %111 = vmatprep.subr.mxu0 0.0
    %112 = vmatpush1.msra.mxu0 0.0
    %113 = vmatprep.subr.mxu0 0.0
    %114 = vmatpush1.msra.mxu0 0.0
    %115 = vmatprep.subr.mxu0 0.0
    %116 = vmatpush1.msra.mxu0 0.0
    %117 = vmatprep.mubr.f32.mxu0 0.0
    %118 = vmatmul.mubr.f32.gmra.mrb[0].mxu0 %v51
    %v119 = vpop.f32.mrb[0].mxu0
    %v120 = vadd.f32 0.0, %v119
    %v121 = vpop.f32.mrb[0].mxu0
    %122 = vdwg.mxu0
    %v123 = vld [vmem:[%s2] sm:$0x1]
    %v124 = vld [vmem:[%s3] sm:$0x1]
    %125 = vadd.xlane.f32.xlu0 %v120
    %v126 = vpop.xlane.xlu0 %125
    %v127 = vmul.f32 %v126, 0.03125
    %v128 = vsub.f32 %v120, %v127
    %v129 = vlaneseq
    %v130 = vand.u32 %v129, 127
    %vm131 = vcmp.lt.s32.totalorder %v130, 32
    %v132 = vsel %vm131, %v128, 0.0
    %v133 = vmul.f32 %v132, %v132
    %134 = vadd.xlane.f32.xlu0 %v133
    %v135 = vpop.xlane.xlu0 %134
    %v136 = vmul.f32 %v135, 0.03125
    %v137 = vadd.f32 %v136, 1e-05
    %v138 = vrsqrt.pop %v137
    %v139 = vmul.f32 %v132, %v138
    %v141 = vlaneseq
    %v142 = vshrl.u32 %v141, 7
    %v143 = vsub.s32 0, %v142
    %v144 = vrot.slane %v123, %v143
    %v146 = vmul.f32 %v139, %v144
    %v148 = vlaneseq
    %v149 = vshrl.u32 %v148, 7
    %v150 = vsub.s32 0, %v149
    %v151 = vrot.slane %v124, %v150
    %v153 = vadd.f32 %v146, %v151
    %v154 = vmax.f32 %v153, 0.0
    %155 = vst [vmem:[#allocation7] sm:$0xff] %v154
    // Predicated region
    $region26: #{tpu_custom_call.1} parent=1 // pred_check
      _
    $region27: #{tpu_custom_call.1} parent=1 // pred_check_branch
      %157 = sbr.rel (0) target = $region29
    $region28: #{tpu_custom_call.1} parent=1 // pred_region
      %s159 = ssub.s32 128, 128
      %160 = vsyncadd [#allocation4], %s159
      %s162 = sshll.u32 [#allocation7], 4
      %s163 = int_to_ptr.vmem [resolvable:$true] %s162
      %165 = dma.vmem_to_hbm [thread:$0]  %s163, 128, %s4, [#allocation4]
    $region29: #{tpu_custom_call.1} parent=1 // pred_fallthru
      _
    // Predicated region
    $region30: #{tpu_custom_call.1} parent=1 // pred_check
      _
    $region31: #{tpu_custom_call.1} parent=1 // pred_check_branch
      %167 = sbr.rel (0) target = $region33
    $region32: #{tpu_custom_call.1} parent=1 // pred_region
      %168 = dma.done [#allocation4], 128
    $region33: #{tpu_custom_call.1} parent=1 // pred_fallthru
      _
    %169 = vsyncpa [#allocation3], 1
    %170 = vsyncpa [#allocation6], 1
    %171 = vsyncpa [#allocation4], 1

</llo_original>
